<compile_context>
chip_gen: v6e
topology: v6e:2x2x1
jax: 0.10.0
libtpu: 0.0.40
codegen_flags: <defaults>
</compile_context>

<pallas_src>
import functools
import math

import jax
import jax.numpy as jnp
from jax import lax
from jax.experimental import pallas as pl
from jax.experimental.pallas import tpu as pltpu

_TEACHER_SCALE = 10.0   # hard-coded in OurLoss.forward


def _dot_nt(a, b):
    """(M, D) x (N, D) -> (M, N): contraction over the lane dim of both
    operands with f32 MXU accumulation (no transpose materialized)."""
    return lax.dot_general(a, b, (((1,), (1,)), ((), ())),
                           preferred_element_type=jnp.float32)


def our_loss_kernel(img_ref, txt_ref, dsum_ref,   # (N, D) resident VMEM
                    part_ref,                      # (8, 128) per-tile partial sum
                    *, block_rows, single_tile, stable):
    i = pl.program_id(0)

    img = img_ref[...]
    txt = txt_ref[...]
    dsum = dsum_ref[...]            # pre-scaled by sqrt(0.25*teacher_scale)

    if single_tile:
        img_q, txt_q, dsum_q = img, txt, dsum
    else:
        row0 = pl.multiple_of(i * block_rows, block_rows)
        img_q = img_ref[pl.ds(row0, block_rows), :]
        txt_q = txt_ref[pl.ds(row0, block_rows), :]
        dsum_q = dsum_ref[pl.ds(row0, block_rows), :]

    # ---- teacher soft-target mask (unnormalized weights + per-row recip) ----
    z = _dot_nt(dsum_q, dsum)                       # (TQ, N) f32, carries 0.25*T
    if stable:
        z = z - jnp.max(z, axis=1, keepdims=True)
    e = jnp.exp(z)
    inv_s = 1.0 / jnp.sum(e, axis=1, keepdims=True)  # (TQ, 1) exact reciprocal

    def masked_log_softmax_sum(logits):
        # sum_ij mask_ij * log_softmax(logits)_ij using sum_j mask_ij == 1:
        #   = sum_i [ inv_s_i * sum_j e_ij*logits_ij  -  logsumexp_i(logits) ]
        weighted = jnp.sum(e * logits, axis=1, keepdims=True)       # (TQ, 1)
        if stable:
            m = jnp.max(logits, axis=1, keepdims=True)
            lse = m + jnp.log(jnp.sum(jnp.exp(logits - m), axis=1, keepdims=True))
        else:
            # L2-normalized features, student scale 1.0 -> |logits| <= 1.
            lse = jnp.log(jnp.sum(jnp.exp(logits), axis=1, keepdims=True))
        return jnp.sum(inv_s * weighted - lse)

    # Compute -> consume each student logit slab before producing the next.
    partial = masked_log_softmax_sum(_dot_nt(txt_q, img))            # t2i
    partial = partial + masked_log_softmax_sum(_dot_nt(img_q, txt))  # i2t

    # Lane-dense per-tile partial sum (unmasked vst); reduced in the wrapper.
    part_ref[...] = jnp.full((8, 128), partial, dtype=jnp.float32)


def our_loss(image_features, text_features, logit_scale,
             dist_image_features, dist_text_features, dist_logit_scale,
             *, block_rows=None, assume_normalized=True):
    """world_size=1 path of OurLoss.forward (features already gathered)."""
    N, D = image_features.shape
    feat_dtype = image_features.dtype
    itemsize = jnp.dtype(feat_dtype).itemsize

    try:
        vmem_cap = int(pltpu.get_tpu_info().vmem_capacity_bytes)
    except Exception:  # non-TPU / older API: assume v5e/v6e capacity
        vmem_cap = 128 * 1024 * 1024

    if block_rows is None:
        # Budget-derived row tile: resident features (single-buffered) plus
        # ~5 live (block_rows, N) f32 slabs must fit in ~70% of physical VMEM.
        budget = int(0.7 * vmem_cap)
        resident = 3 * N * D * itemsize
        per_row = 5 * N * 4
        cand = max((budget - resident) // per_row, 1)
        if cand >= N:
            block_rows = N
        else:
            if cand >= 128 and N % 128 == 0:
                cand = (cand // 128) * 128          # keep MXU M-dim >= 128
            block_rows = next(d for d in range(int(min(cand, N)), 0, -1)
                              if N % d == 0)
    assert N % block_rows == 0, "block_rows must divide the batch size"
    n_tiles = N // block_rows

    # Summed teacher features: f32 add, fold 0.25*teacher_scale as a sqrt so
    # the Gram matmul carries the full factor, cast back to feature dtype once.
    # TODO(synk): optionally cast features to bf16 here for VMEM/HBM savings
    # once the accuracy budget allows it (keep f32 MXU accumulation).
    tsq = math.sqrt(0.25 * _TEACHER_SCALE)
    dsum = ((dist_image_features.astype(jnp.float32)
             + dist_text_features.astype(jnp.float32)) * tsq).astype(feat_dtype)

    kernel = functools.partial(
        our_loss_kernel,
        block_rows=block_rows,
        single_tile=(n_tiles == 1),
        stable=not assume_normalized,
    )

    out_shape = jax.ShapeDtypeStruct((n_tiles * 8, 128), jnp.float32)
    out_spec = pl.BlockSpec((8, 128), lambda i: (i, 0))

    def build(single_buffer):
        n_buf = 1 if single_buffer else 2
        feat_kwargs = {"pipeline_mode": pl.Buffered(1)} if single_buffer else {}
        feat_spec = pl.BlockSpec((N, D), lambda i: (0, 0), **feat_kwargs)
        approx_vmem = (3 * n_buf * N * D * itemsize      # resident features
                       + 5 * block_rows * N * 4          # live f32 slabs
                       + 2 * 8 * 128 * 4)                # output blocks
        vmem_limit = min(max(32 * 1024 * 1024, int(approx_vmem * 1.25)),
                         vmem_cap)
        return pl.pallas_call(
            kernel,
            out_shape=out_shape,
            grid=(n_tiles,),
            in_specs=[feat_spec, feat_spec, feat_spec],
            out_specs=out_spec,
            compiler_params=pltpu.CompilerParams(
                # Per-tile partial sums are independent -> parallel axis
                # (v7x megacore shards row tiles across both TensorCores).
                dimension_semantics=("parallel",),
                vmem_limit_bytes=vmem_limit,
            ),
        )

    args = (image_features, text_features, dsum)
    if hasattr(pl, "Buffered"):
        try:
            out = build(True)(*args)     # single-buffer resident features
        except Exception:
            out = build(False)(*args)    # fallback: default double-buffering
    else:
        out = build(False)(*args)

    partials = out.reshape(n_tiles, 8, 128)[:, 0, 0]
    ratio = (jnp.asarray(dist_logit_scale, jnp.float32)
             / jnp.asarray(logit_scale, jnp.float32))
    return (-0.5 / N) * ratio * jnp.sum(partials)


def our_loss_ref(img, txt, scale, dimg, dtxt, dscale):
    """Pure-JAX mirror of the PyTorch module (world_size=1), original math."""
    def all_logits(a, b, s):
        return s * (a @ a.T), s * (b @ b.T), s * (b @ a.T), s * (a @ b.T)

    t_i2i, t_t2t, t_t2i, t_i2t = all_logits(dimg, dtxt, 10.0)
    _, _, s_t2i, s_i2t = all_logits(img, txt, 1.0)

    sm = lambda x: jax.nn.softmax(x, axis=1)
    mask = (sm(t_i2i) ** 0.25 * sm(t_t2t) ** 0.25
            * sm(t_t2i) ** 0.25 * sm(t_i2t) ** 0.25)
    mask = mask / mask.sum(1, keepdims=True)

    def contrast(logits):
        z = logits - logits.max(1, keepdims=True)
        log_prob = z - jnp.log(jnp.exp(z).sum(1, keepdims=True))
        return jnp.mean(-(dscale / scale) * (mask * log_prob).sum(1))

    return (contrast(s_t2i) + contrast(s_i2t)) / 2


if __name__ == "__main__":
    key = jax.random.PRNGKey(0)
    ks = jax.random.split(key, 8)

    def normed(k, n, d):
        x = jax.random.normal(k, (n, d), dtype=jnp.float32)
        return x / jnp.linalg.norm(x, axis=-1, keepdims=True)

    logit_scale = jnp.float32(1.0 / 0.07)     # student logit scale
    dist_logit_scale = jnp.float32(100.0)     # teacher logit scale

    # 1) toy CLIP shapes, single row tile (grid=(1,)).
    N, D = 8, 32
    img, txt = normed(ks[0], N, D), normed(ks[1], N, D)
    dimg, dtxt = normed(ks[2], N, D), normed(ks[3], N, D)
    loss = our_loss(img, txt, logit_scale, dimg, dtxt, dist_logit_scale)
    jax.block_until_ready(loss)
    ref = our_loss_ref(img, txt, logit_scale, dimg, dtxt, dist_logit_scale)
    assert jnp.allclose(loss, ref, rtol=2e-4, atol=2e-4), (loss, ref)

    # 2) multi-tile path (grid=(4,), 8-row tiles): exercises the per-tile
    #    partial-sum outputs, parallel axis, and dynamic row slicing.
    N2, D2 = 32, 32
    img2, txt2 = normed(ks[4], N2, D2), normed(ks[5], N2, D2)
    dimg2, dtxt2 = normed(ks[6], N2, D2), normed(ks[7], N2, D2)
    loss2 = our_loss(img2, txt2, logit_scale, dimg2, dtxt2, dist_logit_scale,
                     block_rows=8)
    jax.block_until_ready(loss2)
    ref2 = our_loss_ref(img2, txt2, logit_scale, dimg2, dtxt2, dist_logit_scale)
    assert jnp.allclose(loss2, ref2, rtol=2e-4, atol=2e-4), (loss2, ref2)

    print("KERNEL_OK")
</pallas_src>

<mosaic_0001>
module attributes {stable_mosaic.version = 11 : i64} {
  func.func @our_loss_kernel(%arg0: i32, %arg1: memref<8x32xf32, #tpu.memory_space<vmem>>, %arg2: memref<8x32xf32, #tpu.memory_space<vmem>>, %arg3: memref<8x32xf32, #tpu.memory_space<vmem>>, %arg4: memref<8x128xf32, #tpu.memory_space<vmem>>) attributes {dimension_semantics = [#tpu.dimension_semantics<parallel>], iteration_bounds = array<i64: 1>, scalar_prefetch = 0 : i64, scratch_operands = 0 : i64, tpu.core_type = #tpu.core_type<tc>, window_params = [{pipeline_mode = #tpu.pipeline_mode<synchronous>, transform_indices = @transform_0, window_bounds = array<i64: 8, 32>}, {pipeline_mode = #tpu.pipeline_mode<synchronous>, transform_indices = @transform_1, window_bounds = array<i64: 8, 32>}, {pipeline_mode = #tpu.pipeline_mode<synchronous>, transform_indices = @transform_2, window_bounds = array<i64: 8, 32>}, {transform_indices = @transform_3, window_bounds = array<i64: 8, 128>}]} {
    %c0 = arith.constant 0 : index
    %c0_0 = arith.constant 0 : index
    %0 = vector.load %arg1[%c0, %c0_0] : memref<8x32xf32, #tpu.memory_space<vmem>>, vector<8x32xf32>
    %c0_1 = arith.constant 0 : index
    %c0_2 = arith.constant 0 : index
    %1 = vector.load %arg2[%c0_1, %c0_2] : memref<8x32xf32, #tpu.memory_space<vmem>>, vector<8x32xf32>
    %c0_3 = arith.constant 0 : index
    %c0_4 = arith.constant 0 : index
    %2 = vector.load %arg3[%c0_3, %c0_4] : memref<8x32xf32, #tpu.memory_space<vmem>>, vector<8x32xf32>
    %cst = arith.constant dense<0.000000e+00> : vector<8x8xf32>
    %3 = tpu.matmul %2, %2, %cst {dimension_numbers = #tpu.dot_dimension_numbers<[1], [1], [0], [0], [0, 0, 1, 0], [], []>} : vector<8x32xf32>, vector<8x32xf32>, vector<8x8xf32> -> vector<8x8xf32>
    %4 = math.exp %3 : vector<8x8xf32>
    %cst_5 = arith.constant dense<0.000000e+00> : vector<8xf32>
    %5 = vector.multi_reduction <add>, %4, %cst_5 [1] : vector<8x8xf32> to vector<8xf32>
    %6 = vector.shape_cast %5 : vector<8xf32> to vector<8x1xf32>
    %cst_6 = arith.constant 1.000000e+00 : f32
    %7 = vector.broadcast %cst_6 : f32 to vector<8x1xf32>
    %8 = arith.divf %7, %6 : vector<8x1xf32>
    %cst_7 = arith.constant dense<0.000000e+00> : vector<8x8xf32>
    %9 = tpu.matmul %1, %0, %cst_7 {dimension_numbers = #tpu.dot_dimension_numbers<[1], [1], [0], [0], [0, 0, 1, 0], [], []>} : vector<8x32xf32>, vector<8x32xf32>, vector<8x8xf32> -> vector<8x8xf32>
    %10 = arith.mulf %4, %9 : vector<8x8xf32>
    %cst_8 = arith.constant dense<0.000000e+00> : vector<8xf32>
    %11 = vector.multi_reduction <add>, %10, %cst_8 [1] : vector<8x8xf32> to vector<8xf32>
    %12 = vector.shape_cast %11 : vector<8xf32> to vector<8x1xf32>
    %13 = math.exp %9 : vector<8x8xf32>
    %cst_9 = arith.constant dense<0.000000e+00> : vector<8xf32>
    %14 = vector.multi_reduction <add>, %13, %cst_9 [1] : vector<8x8xf32> to vector<8xf32>
    %15 = vector.shape_cast %14 : vector<8xf32> to vector<8x1xf32>
    %16 = math.log %15 : vector<8x1xf32>
    %17 = arith.mulf %8, %12 : vector<8x1xf32>
    %18 = arith.subf %17, %16 : vector<8x1xf32>
    %19 = vector.shape_cast %18 : vector<8x1xf32> to vector<1x8x1xf32>
    %cst_10 = arith.constant dense<0.000000e+00> : vector<1xf32>
    %20 = vector.multi_reduction <add>, %19, %cst_10 [1, 2] : vector<1x8x1xf32> to vector<1xf32>
    %21 = vector.shape_cast %20 : vector<1xf32> to vector<1x1x1xf32>
    %22 = vector.extract %21[0, 0, 0] : f32 from vector<1x1x1xf32>
    %cst_11 = arith.constant dense<0.000000e+00> : vector<8x8xf32>
    %23 = tpu.matmul %0, %1, %cst_11 {dimension_numbers = #tpu.dot_dimension_numbers<[1], [1], [0], [0], [0, 0, 1, 0], [], []>} : vector<8x32xf32>, vector<8x32xf32>, vector<8x8xf32> -> vector<8x8xf32>
    %24 = arith.mulf %4, %23 : vector<8x8xf32>
    %cst_12 = arith.constant dense<0.000000e+00> : vector<8xf32>
    %25 = vector.multi_reduction <add>, %24, %cst_12 [1] : vector<8x8xf32> to vector<8xf32>
    %26 = vector.shape_cast %25 : vector<8xf32> to vector<8x1xf32>
    %27 = math.exp %23 : vector<8x8xf32>
    %cst_13 = arith.constant dense<0.000000e+00> : vector<8xf32>
    %28 = vector.multi_reduction <add>, %27, %cst_13 [1] : vector<8x8xf32> to vector<8xf32>
    %29 = vector.shape_cast %28 : vector<8xf32> to vector<8x1xf32>
    %30 = math.log %29 : vector<8x1xf32>
    %31 = arith.mulf %8, %26 : vector<8x1xf32>
    %32 = arith.subf %31, %30 : vector<8x1xf32>
    %33 = vector.shape_cast %32 : vector<8x1xf32> to vector<1x8x1xf32>
    %cst_14 = arith.constant dense<0.000000e+00> : vector<1xf32>
    %34 = vector.multi_reduction <add>, %33, %cst_14 [1, 2] : vector<1x8x1xf32> to vector<1xf32>
    %35 = vector.shape_cast %34 : vector<1xf32> to vector<1x1x1xf32>
    %36 = vector.extract %35[0, 0, 0] : f32 from vector<1x1x1xf32>
    %37 = arith.addf %22, %36 : f32
    %38 = vector.broadcast %37 : f32 to vector<8x128xf32>
    %c0_15 = arith.constant 0 : index
    %c0_16 = arith.constant 0 : index
    %39 = vector.load %arg4[%c0_15, %c0_16] : memref<8x128xf32, #tpu.memory_space<vmem>>, vector<8x128xf32>
    tpu.vector_store %arg4[%c0_15, %c0_16], %38 {strides = array<i32>} : memref<8x128xf32, #tpu.memory_space<vmem>>, vector<8x128xf32>,
    return
  }
  func.func @transform_0(%arg0: i32) -> (i32, i32) {
    %c0_i32 = arith.constant 0 : i32
    %c0_i32_0 = arith.constant 0 : i32
    %c0_i32_1 = arith.constant 0 : i32
    return %c0_i32, %c0_i32_0 : i32, i32
  }
  func.func @transform_1(%arg0: i32) -> (i32, i32) {
    %c0_i32 = arith.constant 0 : i32
    %c0_i32_0 = arith.constant 0 : i32
    %c0_i32_1 = arith.constant 0 : i32
    return %c0_i32, %c0_i32_0 : i32, i32
  }
  func.func @transform_2(%arg0: i32) -> (i32, i32) {
    %c0_i32 = arith.constant 0 : i32
    %c0_i32_0 = arith.constant 0 : i32
    %c0_i32_1 = arith.constant 0 : i32
    return %c0_i32, %c0_i32_0 : i32, i32
  }
  func.func @transform_3(%arg0: i32) -> (i32, i32) {
    %c0_i32 = arith.constant 0 : i32
    %c0_i32_0 = arith.constant 0 : i32
    return %arg0, %c0_i32 : i32, i32
  }
}

module attributes {stable_mosaic.version = 11 : i64} {
  func.func @our_loss_kernel(%arg0: i32, %arg1: memref<8x32xf32, #tpu.memory_space<vmem>>, %arg2: memref<8x32xf32, #tpu.memory_space<vmem>>, %arg3: memref<8x32xf32, #tpu.memory_space<vmem>>, %arg4: memref<8x128xf32, #tpu.memory_space<vmem>>) attributes {dimension_semantics = [#tpu.dimension_semantics<parallel>], iteration_bounds = array<i64: 1>, scalar_prefetch = 0 : i64, scratch_operands = 0 : i64, tpu.core_type = #tpu.core_type<tc>, window_params = [{pipeline_mode = #tpu.pipeline_mode<synchronous>, transform_indices = @transform_0, window_bounds = array<i64: 8, 32>}, {pipeline_mode = #tpu.pipeline_mode<synchronous>, transform_indices = @transform_1, window_bounds = array<i64: 8, 32>}, {pipeline_mode = #tpu.pipeline_mode<synchronous>, transform_indices = @transform_2, window_bounds = array<i64: 8, 32>}, {transform_indices = @transform_3, window_bounds = array<i64: 8, 128>}]} {
    %c0 = arith.constant 0 : index
    %c0_0 = arith.constant 0 : index
    %0 = vector.load %arg1[%c0, %c0_0] : memref<8x32xf32, #tpu.memory_space<vmem>>, vector<8x32xf32>
    %c0_1 = arith.constant 0 : index
    %c0_2 = arith.constant 0 : index
    %1 = vector.load %arg2[%c0_1, %c0_2] : memref<8x32xf32, #tpu.memory_space<vmem>>, vector<8x32xf32>
    %c0_3 = arith.constant 0 : index
    %c0_4 = arith.constant 0 : index
    %2 = vector.load %arg3[%c0_3, %c0_4] : memref<8x32xf32, #tpu.memory_space<vmem>>, vector<8x32xf32>
    %cst = arith.constant dense<0.000000e+00> : vector<8x8xf32>
    %3 = tpu.matmul %2, %2, %cst {dimension_numbers = #tpu.dot_dimension_numbers<[1], [1], [0], [0], [0, 0, 1, 0], [], []>} : vector<8x32xf32>, vector<8x32xf32>, vector<8x8xf32> -> vector<8x8xf32>
    %4 = math.exp %3 : vector<8x8xf32>
    %cst_5 = arith.constant dense<0.000000e+00> : vector<8xf32>
    %5 = vector.multi_reduction <add>, %4, %cst_5 [1] : vector<8x8xf32> to vector<8xf32>
    %6 = vector.shape_cast %5 : vector<8xf32> to vector<8x1xf32>
    %cst_6 = arith.constant 1.000000e+00 : f32
    %7 = vector.broadcast %cst_6 : f32 to vector<8x1xf32>
    %8 = arith.divf %7, %6 : vector<8x1xf32>
    %cst_7 = arith.constant dense<0.000000e+00> : vector<8x8xf32>
    %9 = tpu.matmul %1, %0, %cst_7 {dimension_numbers = #tpu.dot_dimension_numbers<[1], [1], [0], [0], [0, 0, 1, 0], [], []>} : vector<8x32xf32>, vector<8x32xf32>, vector<8x8xf32> -> vector<8x8xf32>
    %10 = arith.mulf %4, %9 : vector<8x8xf32>
    %cst_8 = arith.constant dense<0.000000e+00> : vector<8xf32>
    %11 = vector.multi_reduction <add>, %10, %cst_8 [1] : vector<8x8xf32> to vector<8xf32>
    %12 = vector.shape_cast %11 : vector<8xf32> to vector<8x1xf32>
    %13 = math.exp %9 : vector<8x8xf32>
    %cst_9 = arith.constant dense<0.000000e+00> : vector<8xf32>
    %14 = vector.multi_reduction <add>, %13, %cst_9 [1] : vector<8x8xf32> to vector<8xf32>
    %15 = vector.shape_cast %14 : vector<8xf32> to vector<8x1xf32>
    %16 = math.log %15 : vector<8x1xf32>
    %17 = arith.mulf %8, %12 : vector<8x1xf32>
    %18 = arith.subf %17, %16 : vector<8x1xf32>
    %19 = vector.shape_cast %18 : vector<8x1xf32> to vector<1x8x1xf32>
    %cst_10 = arith.constant dense<0.000000e+00> : vector<1xf32>
    %20 = vector.multi_reduction <add>, %19, %cst_10 [1, 2] : vector<1x8x1xf32> to vector<1xf32>
    %21 = vector.shape_cast %20 : vector<1xf32> to vector<1x1x1xf32>
    %22 = vector.extract %21[0, 0, 0] : f32 from vector<1x1x1xf32>
    %cst_11 = arith.constant dense<0.000000e+00> : vector<8x8xf32>
    %23 = tpu.matmul %0, %1, %cst_11 {dimension_numbers = #tpu.dot_dimension_numbers<[1], [1], [0], [0], [0, 0, 1, 0], [], []>} : vector<8x32xf32>, vector<8x32xf32>, vector<8x8xf32> -> vector<8x8xf32>
    %24 = arith.mulf %4, %23 : vector<8x8xf32>
    %cst_12 = arith.constant dense<0.000000e+00> : vector<8xf32>
    %25 = vector.multi_reduction <add>, %24, %cst_12 [1] : vector<8x8xf32> to vector<8xf32>
    %26 = vector.shape_cast %25 : vector<8xf32> to vector<8x1xf32>
    %27 = math.exp %23 : vector<8x8xf32>
    %cst_13 = arith.constant dense<0.000000e+00> : vector<8xf32>
    %28 = vector.multi_reduction <add>, %27, %cst_13 [1] : vector<8x8xf32> to vector<8xf32>
    %29 = vector.shape_cast %28 : vector<8xf32> to vector<8x1xf32>
    %30 = math.log %29 : vector<8x1xf32>
    %31 = arith.mulf %8, %26 : vector<8x1xf32>
    %32 = arith.subf %31, %30 : vector<8x1xf32>
    %33 = vector.shape_cast %32 : vector<8x1xf32> to vector<1x8x1xf32>
    %cst_14 = arith.constant dense<0.000000e+00> : vector<1xf32>
    %34 = vector.multi_reduction <add>, %33, %cst_14 [1, 2] : vector<1x8x1xf32> to vector<1xf32>
    %35 = vector.shape_cast %34 : vector<1xf32> to vector<1x1x1xf32>
    %36 = vector.extract %35[0, 0, 0] : f32 from vector<1x1x1xf32>
    %37 = arith.addf %22, %36 : f32
    %38 = vector.broadcast %37 : f32 to vector<8x128xf32>
    %c0_15 = arith.constant 0 : index
    %c0_16 = arith.constant 0 : index
    %39 = vector.load %arg4[%c0_15, %c0_16] : memref<8x128xf32, #tpu.memory_space<vmem>>, vector<8x128xf32>
    tpu.vector_store %arg4[%c0_15, %c0_16], %38 {strides = array<i32>} : memref<8x128xf32, #tpu.memory_space<vmem>>, vector<8x128xf32>,
    return
  }
  func.func @transform_0(%arg0: i32) -> (i32, i32) {
    %c0_i32 = arith.constant 0 : i32
    %c0_i32_0 = arith.constant 0 : i32
    %c0_i32_1 = arith.constant 0 : i32
    return %c0_i32, %c0_i32_0 : i32, i32
  }
  func.func @transform_1(%arg0: i32) -> (i32, i32) {
    %c0_i32 = arith.constant 0 : i32
    %c0_i32_0 = arith.constant 0 : i32
    %c0_i32_1 = arith.constant 0 : i32
    return %c0_i32, %c0_i32_0 : i32, i32
  }
  func.func @transform_2(%arg0: i32) -> (i32, i32) {
    %c0_i32 = arith.constant 0 : i32
    %c0_i32_0 = arith.constant 0 : i32
    %c0_i32_1 = arith.constant 0 : i32
    return %c0_i32, %c0_i32_0 : i32, i32
  }
  func.func @transform_3(%arg0: i32) -> (i32, i32) {
    %c0_i32 = arith.constant 0 : i32
    %c0_i32_0 = arith.constant 0 : i32
    return %arg0, %c0_i32 : i32, i32
  }
}

</mosaic_0001>

<llo_original>
// kernel: tpu_custom_call.1
$region0: #{tpu_custom_call.1}
  #allocation0 [shape = 'u32[]', space=smem, size = 0x4, offset = 0x4, fixed_abs, tag = 'smem constant byte address 0x4 - core index']
  #allocation1 [shape = 'u32[144,128]{1,0:T(1,128)}', space=vmem, size = 0x12000, scoped, tag = 'internal scratch']
  %s0 = inlined_call_operand.hbm [shape: f32[8,32], index: 0, kind: input, shape index: {}]
  %s1 = inlined_call_operand.hbm [shape: f32[8,32], index: 1, kind: input, shape index: {}]
  %s2 = inlined_call_operand.hbm [shape: f32[8,32], index: 2, kind: input, shape index: {}]
  %s3 = inlined_call_operand.hbm [shape: f32[8,128], index: 3, kind: output, shape index: {}]
  %s4 = sld [smem:[#allocation0]]
  $region34: #{tpu_custom_call.1} parent=0
    _
  %s6 = ssub.s32 1, %s4
  %s7 = scalar_select 0, %s6, %s4
  $region1: #{tpu_custom_call.1} parent=0
    #allocation2 [shape = 'u8[4096]{0}', space=vmem, size = 0x1000, scoped, tag = 'input window, operand 0, single buffered']
    #allocation3 [shape = 's32[1]{0}', space=sflag, size = 0x4, scoped, tag = 'scoped memory for tpu_custom_call.1']
    #allocation4 [shape = 's32[1]{0}', space=sflag, size = 0x4, scoped, tag = 'scoped memory for tpu_custom_call.1']
    #allocation5 [shape = 'u8[4096]{0}', space=vmem, size = 0x1000, scoped, tag = 'input window, operand 1, single buffered']
    #allocation6 [shape = 's32[1]{0}', space=sflag, size = 0x4, scoped, tag = 'scoped memory for tpu_custom_call.1']
    #allocation7 [shape = 'u8[4096]{0}', space=vmem, size = 0x1000, scoped, tag = 'input window, operand 2, single buffered']
    #allocation8 [shape = 'u8[4096]{0}', space=vmem, size = 0x1000, scoped, tag = 'output window, operand 0, single buffered']
    %8 = vsyncpa [#allocation3], 0
    %9 = vsyncpa [#allocation6], 0
    %10 = vsyncpa [#allocation4], 0
    // Predicated region
    $region2: #{tpu_custom_call.1} parent=1 // pred_check
      _
    $region3: #{tpu_custom_call.1} parent=1 // pred_check_branch
      %12 = sbr.rel (0) target = $region5
    $region4: #{tpu_custom_call.1} parent=1 // pred_region
      %s14 = ssub.s32 128, 128
      %15 = vsyncadd [#allocation3], %s14
      %s17 = sshll.u32 [#allocation2], 4
      %s18 = int_to_ptr.vmem [resolvable:$true] %s17
      %20 = dma.hbm_to_vmem [thread:$0]  %s0, 128, %s18, [#allocation3]
    $region5: #{tpu_custom_call.1} parent=1 // pred_fallthru
      _
    // Predicated region
    $region6: #{tpu_custom_call.1} parent=1 // pred_check
      _
    $region7: #{tpu_custom_call.1} parent=1 // pred_check_branch
      %22 = sbr.rel (0) target = $region9
    $region8: #{tpu_custom_call.1} parent=1 // pred_region
      %s24 = ssub.s32 128, 128
      %25 = vsyncadd [#allocation6], %s24
      %s27 = sshll.u32 [#allocation5], 4
      %s28 = int_to_ptr.vmem [resolvable:$true] %s27
      %30 = dma.hbm_to_vmem [thread:$0]  %s1, 128, %s28, [#allocation6]
    $region9: #{tpu_custom_call.1} parent=1 // pred_fallthru
      _
    // Predicated region
    $region10: #{tpu_custom_call.1} parent=1 // pred_check
      _
    $region11: #{tpu_custom_call.1} parent=1 // pred_check_branch
      %32 = sbr.rel (0) target = $region13
    $region12: #{tpu_custom_call.1} parent=1 // pred_region
      %s34 = ssub.s32 128, 128
      %35 = vsyncadd [#allocation6], %s34
      %s37 = sshll.u32 [#allocation7], 4
      %s38 = int_to_ptr.vmem [resolvable:$true] %s37
      %40 = dma.hbm_to_vmem [thread:$0]  %s2, 128, %s38, [#allocation6]
    $region13: #{tpu_custom_call.1} parent=1 // pred_fallthru
      _
    // Predicated region
    $region14: #{tpu_custom_call.1} parent=1 // pred_check
      _
    $region15: #{tpu_custom_call.1} parent=1 // pred_check_branch
      %42 = sbr.rel (0) target = $region17
    $region16: #{tpu_custom_call.1} parent=1 // pred_region
      %43 = dma.done [#allocation3], 128
    $region17: #{tpu_custom_call.1} parent=1 // pred_fallthru
      _
    // Predicated region
    $region18: #{tpu_custom_call.1} parent=1 // pred_check
      _
    $region19: #{tpu_custom_call.1} parent=1 // pred_check_branch
      %45 = sbr.rel (0) target = $region21
    $region20: #{tpu_custom_call.1} parent=1 // pred_region
      %46 = dma.done [#allocation6], 128
    $region21: #{tpu_custom_call.1} parent=1 // pred_fallthru
      _
    // Predicated region
    $region22: #{tpu_custom_call.1} parent=1 // pred_check
      _
    $region23: #{tpu_custom_call.1} parent=1 // pred_check_branch
      %48 = sbr.rel (0) target = $region25
    $region24: #{tpu_custom_call.1} parent=1 // pred_region
      %49 = dma.done [#allocation6], 128
    $region25: #{tpu_custom_call.1} parent=1 // pred_fallthru
      _
    %v50 = vld [vmem:[#allocation2] sm:$0xff]
    %v51 = vld [vmem:[#allocation5] sm:$0xff]
    %v52 = vld [vmem:[#allocation7] sm:$0xff]
    %vm53 = vcmask 261120
    %v55 = vsel %vm53, %v52, 0
    %57 = vmatprep.subr.mxu0 0.0
    %58 = vmatpush1.xpose.msra.mxu0 0.0
    %59 = vmatprep.subr.mxu0 0.0
    %60 = vmatpush1.xpose.msra.mxu0 0.0
    %61 = vmatprep.subr.mxu0 0.0
    %62 = vmatpush1.xpose.msra.mxu0 0.0
    %63 = vmatprep.subr.mxu0 0.0
    %64 = vmatpush1.xpose.msra.mxu0 0.0
    %65 = vmatprep.subr.mxu0 0.0
    %66 = vmatpush1.xpose.msra.mxu0 0.0
    %67 = vmatprep.subr.mxu0 0.0
    %68 = vmatpush1.xpose.msra.mxu0 0.0
    %69 = vmatprep.subr.mxu0 0.0
    %70 = vmatpush1.xpose.msra.mxu0 0.0
    %71 = vmatprep.subr.mxu0 0.0
    %72 = vmatpush1.xpose.msra.mxu0 0.0
    %73 = vmatprep.subr.mxu0 0.0
    %74 = vmatpush1.xpose.msra.mxu0 0.0
    %75 = vmatprep.subr.mxu0 0.0
    %76 = vmatpush1.xpose.msra.mxu0 0.0
    %77 = vmatprep.subr.mxu0 0.0
    %78 = vmatpush1.xpose.msra.mxu0 0.0
    %79 = vmatprep.subr.mxu0 0.0
    %80 = vmatpush1.xpose.msra.mxu0 0.0
    %81 = vmatprep.subr.mxu0 0.0
    %82 = vmatpush1.xpose.msra.mxu0 0.0
    %83 = vmatprep.subr.mxu0 0.0
    %84 = vmatpush1.xpose.msra.mxu0 0.0
    %85 = vmatprep.subr.mxu0 0.0
    %86 = vmatpush1.xpose.msra.mxu0 0.0
    %87 = vmatprep.subr.mxu0 0.0
    %88 = vmatpush1.xpose.msra.mxu0 %v55
    %89 = vmatprep.subr.mxu0 0.0
    %90 = vmatpush2.xpose.msra.mxu0 0.0
    %91 = vmatprep.subr.mxu0 0.0
    %92 = vmatpush2.xpose.msra.mxu0 0.0
    %93 = vmatprep.subr.mxu0 0.0
    %94 = vmatpush2.xpose.msra.mxu0 0.0
    %95 = vmatprep.subr.mxu0 0.0
    %96 = vmatpush2.xpose.msra.mxu0 0.0
    %97 = vmatprep.subr.mxu0 0.0
    %98 = vmatpush2.xpose.msra.mxu0 0.0
    %99 = vmatprep.subr.mxu0 0.0
    %100 = vmatpush2.xpose.msra.mxu0 0.0
    %101 = vmatprep.subr.mxu0 0.0
    %102 = vmatpush2.xpose.msra.mxu0 0.0
    %103 = vmatprep.subr.mxu0 0.0
    %104 = vmatpush2.xpose.msra.mxu0 0.0
    %105 = vmatprep.subr.mxu0 0.0
    %106 = vmatpush2.xpose.msra.mxu0 0.0
    %107 = vmatprep.subr.mxu0 0.0
    %108 = vmatpush2.xpose.msra.mxu0 0.0
    %109 = vmatprep.subr.mxu0 0.0
    %110 = vmatpush2.xpose.msra.mxu0 0.0
    %111 = vmatprep.subr.mxu0 0.0
    %112 = vmatpush2.xpose.msra.mxu0 0.0
    %113 = vmatprep.subr.mxu0 0.0
    %114 = vmatpush2.xpose.msra.mxu0 0.0
    %115 = vmatprep.subr.mxu0 0.0
    %116 = vmatpush2.xpose.msra.mxu0 0.0
    %117 = vmatprep.subr.mxu0 0.0
    %118 = vmatpush2.xpose.msra.mxu0 0.0
    %119 = vmatprep.subr.mxu0 0.0
    %120 = vmatpush2.xpose.msra.mxu0 0.0
    %121 = vmatprep.mubr.f32.mxu0 0.0
    %122 = vmatmul.mubr.f32.gmra.mxu0 %v55
    %v123 = vpop.f32.mrf.mxu0
    %v124 = vadd.f32 0.0, %v123
    %v125 = vpop.f32.mrf.mxu0
    %126 = vdwg.mxu0
    %v127 = vmul.f32 %v124, 1.442695
    %v128 = vpow.pop %v127
    %vm129 = vcmask 64512
    %v130 = vsel %vm129, %v128, 0.0
    %131 = vadd.xlane.f32.xlu0 %v130
    %v132 = vpop.xlane.xlu0 %131
    %v133 = vrcp.pop %v132
    %v134 = vmul.f32 1.0, %v133
    %v136 = vsel %vm53, %v51, 0
    %v139 = vsel %vm53, %v50, 0
    %141 = vmatprep.subr.mxu0 0.0
    %142 = vmatpush1.xpose.msra.mxu0 0.0
    %143 = vmatprep.subr.mxu0 0.0
    %144 = vmatpush1.xpose.msra.mxu0 0.0
    %145 = vmatprep.subr.mxu0 0.0
    %146 = vmatpush1.xpose.msra.mxu0 0.0
    %147 = vmatprep.subr.mxu0 0.0
    %148 = vmatpush1.xpose.msra.mxu0 0.0
    %149 = vmatprep.subr.mxu0 0.0
    %150 = vmatpush1.xpose.msra.mxu0 0.0
    %151 = vmatprep.subr.mxu0 0.0
    %152 = vmatpush1.xpose.msra.mxu0 0.0
    %153 = vmatprep.subr.mxu0 0.0
    %154 = vmatpush1.xpose.msra.mxu0 0.0
    %155 = vmatprep.subr.mxu0 0.0
    %156 = vmatpush1.xpose.msra.mxu0 0.0
    %157 = vmatprep.subr.mxu0 0.0
    %158 = vmatpush1.xpose.msra.mxu0 0.0
    %159 = vmatprep.subr.mxu0 0.0
    %160 = vmatpush1.xpose.msra.mxu0 0.0
    %161 = vmatprep.subr.mxu0 0.0
    %162 = vmatpush1.xpose.msra.mxu0 0.0
    %163 = vmatprep.subr.mxu0 0.0
    %164 = vmatpush1.xpose.msra.mxu0 0.0
    %165 = vmatprep.subr.mxu0 0.0
    %166 = vmatpush1.xpose.msra.mxu0 0.0
    %167 = vmatprep.subr.mxu0 0.0
    %168 = vmatpush1.xpose.msra.mxu0 0.0
    %169 = vmatprep.subr.mxu0 0.0
    %170 = vmatpush1.xpose.msra.mxu0 0.0
    %171 = vmatprep.subr.mxu0 0.0
    %172 = vmatpush1.xpose.msra.mxu0 %v139
    %173 = vmatprep.subr.mxu0 0.0
    %174 = vmatpush2.xpose.msra.mxu0 0.0
    %175 = vmatprep.subr.mxu0 0.0
    %176 = vmatpush2.xpose.msra.mxu0 0.0
    %177 = vmatprep.subr.mxu0 0.0
    %178 = vmatpush2.xpose.msra.mxu0 0.0
    %179 = vmatprep.subr.mxu0 0.0
    %180 = vmatpush2.xpose.msra.mxu0 0.0
    %181 = vmatprep.subr.mxu0 0.0
    %182 = vmatpush2.xpose.msra.mxu0 0.0
    %183 = vmatprep.subr.mxu0 0.0
    %184 = vmatpush2.xpose.msra.mxu0 0.0
    %185 = vmatprep.subr.mxu0 0.0
    %186 = vmatpush2.xpose.msra.mxu0 0.0
    %187 = vmatprep.subr.mxu0 0.0
    %188 = vmatpush2.xpose.msra.mxu0 0.0
    %189 = vmatprep.subr.mxu0 0.0
    %190 = vmatpush2.xpose.msra.mxu0 0.0
    %191 = vmatprep.subr.mxu0 0.0
    %192 = vmatpush2.xpose.msra.mxu0 0.0
    %193 = vmatprep.subr.mxu0 0.0
    %194 = vmatpush2.xpose.msra.mxu0 0.0
    %195 = vmatprep.subr.mxu0 0.0
    %196 = vmatpush2.xpose.msra.mxu0 0.0
    %197 = vmatprep.subr.mxu0 0.0
    %198 = vmatpush2.xpose.msra.mxu0 0.0
    %199 = vmatprep.subr.mxu0 0.0
    %200 = vmatpush2.xpose.msra.mxu0 0.0
    %201 = vmatprep.subr.mxu0 0.0
    %202 = vmatpush2.xpose.msra.mxu0 0.0
    %203 = vmatprep.subr.mxu0 0.0
    %204 = vmatpush2.xpose.msra.mxu0 0.0
    %205 = vmatprep.mubr.f32.mxu0 0.0
    %206 = vmatmul.mubr.f32.gmra.mxu0 %v136
    %v207 = vpop.f32.mrf.mxu0
    %v208 = vadd.f32 0.0, %v207
    %v209 = vpop.f32.mrf.mxu0
    %210 = vdwg.mxu0
    %v211 = vmul.f32 %v128, %v208
    %v212 = vsel %vm129, %v211, 0.0
    %213 = vadd.xlane.f32.xlu0 %v212
    %v214 = vpop.xlane.xlu0 %213
    %v215 = vmul.f32 %v208, 1.442695
    %v216 = vpow.pop %v215
    %v217 = vsel %vm129, %v216, 0.0
    %218 = vadd.xlane.f32.xlu0 %v217
    %v219 = vpop.xlane.xlu0 %218
    %v220 = vlog2.pop %v219
    %v221 = vmul.f32 %v220, 0.6931472
    %v222 = vmul.f32 %v134, %v214
    %v223 = vsub.f32 %v222, %v221
    %vm224 = vcmask 7168
    %v225 = vsel %vm224, %v223, 0.0
    %226 = vadd.xlane.f32.xlu0 %v225
    %v227 = vpop.xlane.xlu0 %226
    %v228 = vrot.slane %v227, 4
    %v229 = vadd.f32 %v227, %v228
    %v230 = vrot.slane %v229, 2
    %v231 = vadd.f32 %v229, %v230
    %v232 = vrot.slane %v231, 1
    %v233 = vadd.f32 %v231, %v232
    %s234 = vtos %v233
    %235 = vmatprep.subr.mxu0 0.0
    %236 = vmatpush1.xpose.msra.mxu0 0.0
    %237 = vmatprep.subr.mxu0 0.0
    %238 = vmatpush1.xpose.msra.mxu0 0.0
    %239 = vmatprep.subr.mxu0 0.0
    %240 = vmatpush1.xpose.msra.mxu0 0.0
    %241 = vmatprep.subr.mxu0 0.0
    %242 = vmatpush1.xpose.msra.mxu0 0.0
    %243 = vmatprep.subr.mxu0 0.0
    %244 = vmatpush1.xpose.msra.mxu0 0.0
    %245 = vmatprep.subr.mxu0 0.0
    %246 = vmatpush1.xpose.msra.mxu0 0.0
    %247 = vmatprep.subr.mxu0 0.0
    %248 = vmatpush1.xpose.msra.mxu0 0.0
    %249 = vmatprep.subr.mxu0 0.0
    %250 = vmatpush1.xpose.msra.mxu0 0.0
    %251 = vmatprep.subr.mxu0 0.0
    %252 = vmatpush1.xpose.msra.mxu0 0.0
    %253 = vmatprep.subr.mxu0 0.0
    %254 = vmatpush1.xpose.msra.mxu0 0.0
    %255 = vmatprep.subr.mxu0 0.0
    %256 = vmatpush1.xpose.msra.mxu0 0.0
    %257 = vmatprep.subr.mxu0 0.0
    %258 = vmatpush1.xpose.msra.mxu0 0.0
    %259 = vmatprep.subr.mxu0 0.0
    %260 = vmatpush1.xpose.msra.mxu0 0.0
    %261 = vmatprep.subr.mxu0 0.0
    %262 = vmatpush1.xpose.msra.mxu0 0.0
    %263 = vmatprep.subr.mxu0 0.0
    %264 = vmatpush1.xpose.msra.mxu0 0.0
    %265 = vmatprep.subr.mxu0 0.0
    %266 = vmatpush1.xpose.msra.mxu0 %v136
    %267 = vmatprep.subr.mxu0 0.0
    %268 = vmatpush2.xpose.msra.mxu0 0.0
    %269 = vmatprep.subr.mxu0 0.0
    %270 = vmatpush2.xpose.msra.mxu0 0.0
    %271 = vmatprep.subr.mxu0 0.0
    %272 = vmatpush2.xpose.msra.mxu0 0.0
    %273 = vmatprep.subr.mxu0 0.0
    %274 = vmatpush2.xpose.msra.mxu0 0.0
    %275 = vmatprep.subr.mxu0 0.0
    %276 = vmatpush2.xpose.msra.mxu0 0.0
    %277 = vmatprep.subr.mxu0 0.0
    %278 = vmatpush2.xpose.msra.mxu0 0.0
    %279 = vmatprep.subr.mxu0 0.0
    %280 = vmatpush2.xpose.msra.mxu0 0.0
    %281 = vmatprep.subr.mxu0 0.0
    %282 = vmatpush2.xpose.msra.mxu0 0.0
    %283 = vmatprep.subr.mxu0 0.0
    %284 = vmatpush2.xpose.msra.mxu0 0.0
    %285 = vmatprep.subr.mxu0 0.0
    %286 = vmatpush2.xpose.msra.mxu0 0.0
    %287 = vmatprep.subr.mxu0 0.0
    %288 = vmatpush2.xpose.msra.mxu0 0.0
    %289 = vmatprep.subr.mxu0 0.0
    %290 = vmatpush2.xpose.msra.mxu0 0.0
    %291 = vmatprep.subr.mxu0 0.0
    %292 = vmatpush2.xpose.msra.mxu0 0.0
    %293 = vmatprep.subr.mxu0 0.0
    %294 = vmatpush2.xpose.msra.mxu0 0.0
    %295 = vmatprep.subr.mxu0 0.0
    %296 = vmatpush2.xpose.msra.mxu0 0.0
    %297 = vmatprep.subr.mxu0 0.0
    %298 = vmatpush2.xpose.msra.mxu0 0.0
    %299 = vmatprep.mubr.f32.mxu0 0.0
    %300 = vmatmul.mubr.f32.gmra.mxu0 %v139
    %v301 = vpop.f32.mrf.mxu0
    %v302 = vadd.f32 0.0, %v301
    %v303 = vpop.f32.mrf.mxu0
    %304 = vdwg.mxu0
    %v305 = vmul.f32 %v128, %v302
    %v306 = vsel %vm129, %v305, 0.0
    %307 = vadd.xlane.f32.xlu0 %v306
    %v308 = vpop.xlane.xlu0 %307
    %v309 = vmul.f32 %v302, 1.442695
    %v310 = vpow.pop %v309
    %v311 = vsel %vm129, %v310, 0.0
    %312 = vadd.xlane.f32.xlu0 %v311
    %v313 = vpop.xlane.xlu0 %312
    %v314 = vlog2.pop %v313
    %v315 = vmul.f32 %v314, 0.6931472
    %v316 = vmul.f32 %v134, %v308
    %v317 = vsub.f32 %v316, %v315
    %v318 = vsel %vm224, %v317, 0.0
    %319 = vadd.xlane.f32.xlu0 %v318
    %v320 = vpop.xlane.xlu0 %319
    %v321 = vrot.slane %v320, 4
    %v322 = vadd.f32 %v320, %v321
    %v323 = vrot.slane %v322, 2
    %v324 = vadd.f32 %v322, %v323
    %v325 = vrot.slane %v324, 1
    %v326 = vadd.f32 %v324, %v325
    %s327 = vtos %v326
    %s328 = sadd.f32 %s234, %s327
    %v329 = vstv %s328
    %330 = vst [vmem:[#allocation8] sm:$0xff] %v329
    // Predicated region
    $region26: #{tpu_custom_call.1} parent=1 // pred_check
      _
    $region27: #{tpu_custom_call.1} parent=1 // pred_check_branch
      %332 = sbr.rel (0) target = $region29
    $region28: #{tpu_custom_call.1} parent=1 // pred_region
      %s334 = ssub.s32 128, 128
      %335 = vsyncadd [#allocation4], %s334
      %s337 = sshll.u32 [#allocation8], 4
      %s338 = int_to_ptr.vmem [resolvable:$true] %s337
      %340 = dma.vmem_to_hbm [thread:$0]  %s338, 128, %s3, [#allocation4]
    $region29: #{tpu_custom_call.1} parent=1 // pred_fallthru
      _
    // Predicated region
    $region30: #{tpu_custom_call.1} parent=1 // pred_check
      _
    $region31: #{tpu_custom_call.1} parent=1 // pred_check_branch
      %342 = sbr.rel (0) target = $region33
    $region32: #{tpu_custom_call.1} parent=1 // pred_region
      %343 = dma.done [#allocation4], 128
    $region33: #{tpu_custom_call.1} parent=1 // pred_fallthru
      _
    %344 = vsyncpa [#allocation3], 1
    %345 = vsyncpa [#allocation6], 1
    %346 = vsyncpa [#allocation4], 1

// kernel: tpu_custom_call.1
$region0: #{tpu_custom_call.1}
  #allocation0 [shape = 'u32[]', space=smem, size = 0x4, offset = 0x4, fixed_abs, tag = 'smem constant byte address 0x4 - core index']
  #allocation1 [shape = 'u32[144,128]{1,0:T(1,128)}', space=vmem, size = 0x12000, scoped, tag = 'internal scratch']
  %s0 = inlined_call_operand.hbm [shape: f32[8,32], index: 0, kind: input, shape index: {}]
  %s1 = inlined_call_operand.hbm [shape: f32[8,32], index: 1, kind: input, shape index: {}]
  %s2 = inlined_call_operand.hbm [shape: f32[8,32], index: 2, kind: input, shape index: {}]
  %s3 = inlined_call_operand.hbm [shape: f32[8,128], index: 3, kind: output, shape index: {}]
  %s4 = sld [smem:[#allocation0]]
  $region34: #{tpu_custom_call.1} parent=0
    _
  %s6 = ssub.s32 1, %s4
  %s7 = scalar_select 0, %s6, %s4
  $region1: #{tpu_custom_call.1} parent=0
    #allocation2 [shape = 'u8[4096]{0}', space=vmem, size = 0x1000, scoped, tag = 'input window, operand 0, single buffered']
    #allocation3 [shape = 's32[1]{0}', space=sflag, size = 0x4, scoped, tag = 'scoped memory for tpu_custom_call.1']
    #allocation4 [shape = 's32[1]{0}', space=sflag, size = 0x4, scoped, tag = 'scoped memory for tpu_custom_call.1']
    #allocation5 [shape = 'u8[4096]{0}', space=vmem, size = 0x1000, scoped, tag = 'input window, operand 1, single buffered']
    #allocation6 [shape = 's32[1]{0}', space=sflag, size = 0x4, scoped, tag = 'scoped memory for tpu_custom_call.1']
    #allocation7 [shape = 'u8[4096]{0}', space=vmem, size = 0x1000, scoped, tag = 'input window, operand 2, single buffered']
    #allocation8 [shape = 'u8[4096]{0}', space=vmem, size = 0x1000, scoped, tag = 'output window, operand 0, single buffered']
    %8 = vsyncpa [#allocation3], 0
    %9 = vsyncpa [#allocation6], 0
    %10 = vsyncpa [#allocation4], 0
    // Predicated region
    $region2: #{tpu_custom_call.1} parent=1 // pred_check
      _
    $region3: #{tpu_custom_call.1} parent=1 // pred_check_branch
      %12 = sbr.rel (0) target = $region5
    $region4: #{tpu_custom_call.1} parent=1 // pred_region
      %s14 = ssub.s32 128, 128
      %15 = vsyncadd [#allocation3], %s14
      %s17 = sshll.u32 [#allocation2], 4
      %s18 = int_to_ptr.vmem [resolvable:$true] %s17
      %20 = dma.hbm_to_vmem [thread:$0]  %s0, 128, %s18, [#allocation3]
    $region5: #{tpu_custom_call.1} parent=1 // pred_fallthru
      _
    // Predicated region
    $region6: #{tpu_custom_call.1} parent=1 // pred_check
      _
    $region7: #{tpu_custom_call.1} parent=1 // pred_check_branch
      %22 = sbr.rel (0) target = $region9
    $region8: #{tpu_custom_call.1} parent=1 // pred_region
      %s24 = ssub.s32 128, 128
      %25 = vsyncadd [#allocation6], %s24
      %s27 = sshll.u32 [#allocation5], 4
      %s28 = int_to_ptr.vmem [resolvable:$true] %s27
      %30 = dma.hbm_to_vmem [thread:$0]  %s1, 128, %s28, [#allocation6]
    $region9: #{tpu_custom_call.1} parent=1 // pred_fallthru
      _
    // Predicated region
    $region10: #{tpu_custom_call.1} parent=1 // pred_check
      _
    $region11: #{tpu_custom_call.1} parent=1 // pred_check_branch
      %32 = sbr.rel (0) target = $region13
    $region12: #{tpu_custom_call.1} parent=1 // pred_region
      %s34 = ssub.s32 128, 128
      %35 = vsyncadd [#allocation6], %s34
      %s37 = sshll.u32 [#allocation7], 4
      %s38 = int_to_ptr.vmem [resolvable:$true] %s37
      %40 = dma.hbm_to_vmem [thread:$0]  %s2, 128, %s38, [#allocation6]
    $region13: #{tpu_custom_call.1} parent=1 // pred_fallthru
      _
    // Predicated region
    $region14: #{tpu_custom_call.1} parent=1 // pred_check
      _
    $region15: #{tpu_custom_call.1} parent=1 // pred_check_branch
      %42 = sbr.rel (0) target = $region17
    $region16: #{tpu_custom_call.1} parent=1 // pred_region
      %43 = dma.done [#allocation3], 128
    $region17: #{tpu_custom_call.1} parent=1 // pred_fallthru
      _
    // Predicated region
    $region18: #{tpu_custom_call.1} parent=1 // pred_check
      _
    $region19: #{tpu_custom_call.1} parent=1 // pred_check_branch
      %45 = sbr.rel (0) target = $region21
    $region20: #{tpu_custom_call.1} parent=1 // pred_region
      %46 = dma.done [#allocation6], 128
    $region21: #{tpu_custom_call.1} parent=1 // pred_fallthru
      _
    // Predicated region
    $region22: #{tpu_custom_call.1} parent=1 // pred_check
      _
    $region23: #{tpu_custom_call.1} parent=1 // pred_check_branch
      %48 = sbr.rel (0) target = $region25
    $region24: #{tpu_custom_call.1} parent=1 // pred_region
      %49 = dma.done [#allocation6], 128
    $region25: #{tpu_custom_call.1} parent=1 // pred_fallthru
      _
    %v50 = vld [vmem:[#allocation2] sm:$0xff]
    %v51 = vld [vmem:[#allocation5] sm:$0xff]
    %v52 = vld [vmem:[#allocation7] sm:$0xff]
    %vm53 = vcmask 261120
    %v55 = vsel %vm53, %v52, 0
    %57 = vmatprep.subr.mxu0 0.0
    %58 = vmatpush1.xpose.msra.mxu0 0.0
    %59 = vmatprep.subr.mxu0 0.0
    %60 = vmatpush1.xpose.msra.mxu0 0.0
    %61 = vmatprep.subr.mxu0 0.0
    %62 = vmatpush1.xpose.msra.mxu0 0.0
    %63 = vmatprep.subr.mxu0 0.0
    %64 = vmatpush1.xpose.msra.mxu0 0.0
    %65 = vmatprep.subr.mxu0 0.0
    %66 = vmatpush1.xpose.msra.mxu0 0.0
    %67 = vmatprep.subr.mxu0 0.0
    %68 = vmatpush1.xpose.msra.mxu0 0.0
    %69 = vmatprep.subr.mxu0 0.0
    %70 = vmatpush1.xpose.msra.mxu0 0.0
    %71 = vmatprep.subr.mxu0 0.0
    %72 = vmatpush1.xpose.msra.mxu0 0.0
    %73 = vmatprep.subr.mxu0 0.0
    %74 = vmatpush1.xpose.msra.mxu0 0.0
    %75 = vmatprep.subr.mxu0 0.0
    %76 = vmatpush1.xpose.msra.mxu0 0.0
    %77 = vmatprep.subr.mxu0 0.0
    %78 = vmatpush1.xpose.msra.mxu0 0.0
    %79 = vmatprep.subr.mxu0 0.0
    %80 = vmatpush1.xpose.msra.mxu0 0.0
    %81 = vmatprep.subr.mxu0 0.0
    %82 = vmatpush1.xpose.msra.mxu0 0.0
    %83 = vmatprep.subr.mxu0 0.0
    %84 = vmatpush1.xpose.msra.mxu0 0.0
    %85 = vmatprep.subr.mxu0 0.0
    %86 = vmatpush1.xpose.msra.mxu0 0.0
    %87 = vmatprep.subr.mxu0 0.0
    %88 = vmatpush1.xpose.msra.mxu0 %v55
    %89 = vmatprep.subr.mxu0 0.0
    %90 = vmatpush2.xpose.msra.mxu0 0.0
    %91 = vmatprep.subr.mxu0 0.0
    %92 = vmatpush2.xpose.msra.mxu0 0.0
    %93 = vmatprep.subr.mxu0 0.0
    %94 = vmatpush2.xpose.msra.mxu0 0.0
    %95 = vmatprep.subr.mxu0 0.0
    %96 = vmatpush2.xpose.msra.mxu0 0.0
    %97 = vmatprep.subr.mxu0 0.0
    %98 = vmatpush2.xpose.msra.mxu0 0.0
    %99 = vmatprep.subr.mxu0 0.0
    %100 = vmatpush2.xpose.msra.mxu0 0.0
    %101 = vmatprep.subr.mxu0 0.0
    %102 = vmatpush2.xpose.msra.mxu0 0.0
    %103 = vmatprep.subr.mxu0 0.0
    %104 = vmatpush2.xpose.msra.mxu0 0.0
    %105 = vmatprep.subr.mxu0 0.0
    %106 = vmatpush2.xpose.msra.mxu0 0.0
    %107 = vmatprep.subr.mxu0 0.0
    %108 = vmatpush2.xpose.msra.mxu0 0.0
    %109 = vmatprep.subr.mxu0 0.0
    %110 = vmatpush2.xpose.msra.mxu0 0.0
    %111 = vmatprep.subr.mxu0 0.0
    %112 = vmatpush2.xpose.msra.mxu0 0.0
    %113 = vmatprep.subr.mxu0 0.0
    %114 = vmatpush2.xpose.msra.mxu0 0.0
    %115 = vmatprep.subr.mxu0 0.0
    %116 = vmatpush2.xpose.msra.mxu0 0.0
    %117 = vmatprep.subr.mxu0 0.0
    %118 = vmatpush2.xpose.msra.mxu0 0.0
    %119 = vmatprep.subr.mxu0 0.0
    %120 = vmatpush2.xpose.msra.mxu0 0.0
    %121 = vmatprep.mubr.f32.mxu0 0.0
    %122 = vmatmul.mubr.f32.gmra.mxu0 %v55
    %v123 = vpop.f32.mrf.mxu0
    %v124 = vadd.f32 0.0, %v123
    %v125 = vpop.f32.mrf.mxu0
    %126 = vdwg.mxu0
    %v127 = vmul.f32 %v124, 1.442695
    %v128 = vpow.pop %v127
    %vm129 = vcmask 64512
    %v130 = vsel %vm129, %v128, 0.0
    %131 = vadd.xlane.f32.xlu0 %v130
    %v132 = vpop.xlane.xlu0 %131
    %v133 = vrcp.pop %v132
    %v134 = vmul.f32 1.0, %v133
    %v136 = vsel %vm53, %v51, 0
    %v139 = vsel %vm53, %v50, 0
    %141 = vmatprep.subr.mxu0 0.0
    %142 = vmatpush1.xpose.msra.mxu0 0.0
    %143 = vmatprep.subr.mxu0 0.0
    %144 = vmatpush1.xpose.msra.mxu0 0.0
    %145 = vmatprep.subr.mxu0 0.0
    %146 = vmatpush1.xpose.msra.mxu0 0.0
    %147 = vmatprep.subr.mxu0 0.0
    %148 = vmatpush1.xpose.msra.mxu0 0.0
    %149 = vmatprep.subr.mxu0 0.0
    %150 = vmatpush1.xpose.msra.mxu0 0.0
    %151 = vmatprep.subr.mxu0 0.0
    %152 = vmatpush1.xpose.msra.mxu0 0.0
    %153 = vmatprep.subr.mxu0 0.0
    %154 = vmatpush1.xpose.msra.mxu0 0.0
    %155 = vmatprep.subr.mxu0 0.0
    %156 = vmatpush1.xpose.msra.mxu0 0.0
    %157 = vmatprep.subr.mxu0 0.0
    %158 = vmatpush1.xpose.msra.mxu0 0.0
    %159 = vmatprep.subr.mxu0 0.0
    %160 = vmatpush1.xpose.msra.mxu0 0.0
    %161 = vmatprep.subr.mxu0 0.0
    %162 = vmatpush1.xpose.msra.mxu0 0.0
    %163 = vmatprep.subr.mxu0 0.0
    %164 = vmatpush1.xpose.msra.mxu0 0.0
    %165 = vmatprep.subr.mxu0 0.0
    %166 = vmatpush1.xpose.msra.mxu0 0.0
    %167 = vmatprep.subr.mxu0 0.0
    %168 = vmatpush1.xpose.msra.mxu0 0.0
    %169 = vmatprep.subr.mxu0 0.0
    %170 = vmatpush1.xpose.msra.mxu0 0.0
    %171 = vmatprep.subr.mxu0 0.0
    %172 = vmatpush1.xpose.msra.mxu0 %v139
    %173 = vmatprep.subr.mxu0 0.0
    %174 = vmatpush2.xpose.msra.mxu0 0.0
    %175 = vmatprep.subr.mxu0 0.0
    %176 = vmatpush2.xpose.msra.mxu0 0.0
    %177 = vmatprep.subr.mxu0 0.0
    %178 = vmatpush2.xpose.msra.mxu0 0.0
    %179 = vmatprep.subr.mxu0 0.0
    %180 = vmatpush2.xpose.msra.mxu0 0.0
    %181 = vmatprep.subr.mxu0 0.0
    %182 = vmatpush2.xpose.msra.mxu0 0.0
    %183 = vmatprep.subr.mxu0 0.0
    %184 = vmatpush2.xpose.msra.mxu0 0.0
    %185 = vmatprep.subr.mxu0 0.0
    %186 = vmatpush2.xpose.msra.mxu0 0.0
    %187 = vmatprep.subr.mxu0 0.0
    %188 = vmatpush2.xpose.msra.mxu0 0.0
    %189 = vmatprep.subr.mxu0 0.0
    %190 = vmatpush2.xpose.msra.mxu0 0.0
    %191 = vmatprep.subr.mxu0 0.0
    %192 = vmatpush2.xpose.msra.mxu0 0.0
    %193 = vmatprep.subr.mxu0 0.0
    %194 = vmatpush2.xpose.msra.mxu0 0.0
    %195 = vmatprep.subr.mxu0 0.0
    %196 = vmatpush2.xpose.msra.mxu0 0.0
    %197 = vmatprep.subr.mxu0 0.0
    %198 = vmatpush2.xpose.msra.mxu0 0.0
    %199 = vmatprep.subr.mxu0 0.0
    %200 = vmatpush2.xpose.msra.mxu0 0.0
    %201 = vmatprep.subr.mxu0 0.0
    %202 = vmatpush2.xpose.msra.mxu0 0.0
    %203 = vmatprep.subr.mxu0 0.0
    %204 = vmatpush2.xpose.msra.mxu0 0.0
    %205 = vmatprep.mubr.f32.mxu0 0.0
    %206 = vmatmul.mubr.f32.gmra.mxu0 %v136
    %v207 = vpop.f32.mrf.mxu0
    %v208 = vadd.f32 0.0, %v207
    %v209 = vpop.f32.mrf.mxu0
    %210 = vdwg.mxu0
    %v211 = vmul.f32 %v128, %v208
    %v212 = vsel %vm129, %v211, 0.0
    %213 = vadd.xlane.f32.xlu0 %v212
    %v214 = vpop.xlane.xlu0 %213
    %v215 = vmul.f32 %v208, 1.442695
    %v216 = vpow.pop %v215
    %v217 = vsel %vm129, %v216, 0.0
    %218 = vadd.xlane.f32.xlu0 %v217
    %v219 = vpop.xlane.xlu0 %218
    %v220 = vlog2.pop %v219
    %v221 = vmul.f32 %v220, 0.6931472
    %v222 = vmul.f32 %v134, %v214
    %v223 = vsub.f32 %v222, %v221
    %vm224 = vcmask 7168
    %v225 = vsel %vm224, %v223, 0.0
    %226 = vadd.xlane.f32.xlu0 %v225
    %v227 = vpop.xlane.xlu0 %226
    %v228 = vrot.slane %v227, 4
    %v229 = vadd.f32 %v227, %v228
    %v230 = vrot.slane %v229, 2
    %v231 = vadd.f32 %v229, %v230
    %v232 = vrot.slane %v231, 1
    %v233 = vadd.f32 %v231, %v232
    %s234 = vtos %v233
    %235 = vmatprep.subr.mxu0 0.0
    %236 = vmatpush1.xpose.msra.mxu0 0.0
    %237 = vmatprep.subr.mxu0 0.0
    %238 = vmatpush1.xpose.msra.mxu0 0.0
    %239 = vmatprep.subr.mxu0 0.0
    %240 = vmatpush1.xpose.msra.mxu0 0.0
    %241 = vmatprep.subr.mxu0 0.0
    %242 = vmatpush1.xpose.msra.mxu0 0.0
    %243 = vmatprep.subr.mxu0 0.0
    %244 = vmatpush1.xpose.msra.mxu0 0.0
    %245 = vmatprep.subr.mxu0 0.0
    %246 = vmatpush1.xpose.msra.mxu0 0.0
    %247 = vmatprep.subr.mxu0 0.0
    %248 = vmatpush1.xpose.msra.mxu0 0.0
    %249 = vmatprep.subr.mxu0 0.0
    %250 = vmatpush1.xpose.msra.mxu0 0.0
    %251 = vmatprep.subr.mxu0 0.0
    %252 = vmatpush1.xpose.msra.mxu0 0.0
    %253 = vmatprep.subr.mxu0 0.0
    %254 = vmatpush1.xpose.msra.mxu0 0.0
    %255 = vmatprep.subr.mxu0 0.0
    %256 = vmatpush1.xpose.msra.mxu0 0.0
    %257 = vmatprep.subr.mxu0 0.0
    %258 = vmatpush1.xpose.msra.mxu0 0.0
    %259 = vmatprep.subr.mxu0 0.0
    %260 = vmatpush1.xpose.msra.mxu0 0.0
    %261 = vmatprep.subr.mxu0 0.0
    %262 = vmatpush1.xpose.msra.mxu0 0.0
    %263 = vmatprep.subr.mxu0 0.0
    %264 = vmatpush1.xpose.msra.mxu0 0.0
    %265 = vmatprep.subr.mxu0 0.0
    %266 = vmatpush1.xpose.msra.mxu0 %v136
    %267 = vmatprep.subr.mxu0 0.0
    %268 = vmatpush2.xpose.msra.mxu0 0.0
    %269 = vmatprep.subr.mxu0 0.0
    %270 = vmatpush2.xpose.msra.mxu0 0.0
    %271 = vmatprep.subr.mxu0 0.0
    %272 = vmatpush2.xpose.msra.mxu0 0.0
    %273 = vmatprep.subr.mxu0 0.0
    %274 = vmatpush2.xpose.msra.mxu0 0.0
    %275 = vmatprep.subr.mxu0 0.0
    %276 = vmatpush2.xpose.msra.mxu0 0.0
    %277 = vmatprep.subr.mxu0 0.0
    %278 = vmatpush2.xpose.msra.mxu0 0.0
    %279 = vmatprep.subr.mxu0 0.0
    %280 = vmatpush2.xpose.msra.mxu0 0.0
    %281 = vmatprep.subr.mxu0 0.0
    %282 = vmatpush2.xpose.msra.mxu0 0.0
    %283 = vmatprep.subr.mxu0 0.0
    %284 = vmatpush2.xpose.msra.mxu0 0.0
    %285 = vmatprep.subr.mxu0 0.0
    %286 = vmatpush2.xpose.msra.mxu0 0.0
    %287 = vmatprep.subr.mxu0 0.0
    %288 = vmatpush2.xpose.msra.mxu0 0.0
    %289 = vmatprep.subr.mxu0 0.0
    %290 = vmatpush2.xpose.msra.mxu0 0.0
    %291 = vmatprep.subr.mxu0 0.0
    %292 = vmatpush2.xpose.msra.mxu0 0.0
    %293 = vmatprep.subr.mxu0 0.0
    %294 = vmatpush2.xpose.msra.mxu0 0.0
    %295 = vmatprep.subr.mxu0 0.0
    %296 = vmatpush2.xpose.msra.mxu0 0.0
    %297 = vmatprep.subr.mxu0 0.0
    %298 = vmatpush2.xpose.msra.mxu0 0.0
    %299 = vmatprep.mubr.f32.mxu0 0.0
    %300 = vmatmul.mubr.f32.gmra.mxu0 %v139
    %v301 = vpop.f32.mrf.mxu0
    %v302 = vadd.f32 0.0, %v301
    %v303 = vpop.f32.mrf.mxu0
    %304 = vdwg.mxu0
    %v305 = vmul.f32 %v128, %v302
    %v306 = vsel %vm129, %v305, 0.0
    %307 = vadd.xlane.f32.xlu0 %v306
    %v308 = vpop.xlane.xlu0 %307
    %v309 = vmul.f32 %v302, 1.442695
    %v310 = vpow.pop %v309
    %v311 = vsel %vm129, %v310, 0.0
    %312 = vadd.xlane.f32.xlu0 %v311
    %v313 = vpop.xlane.xlu0 %312
    %v314 = vlog2.pop %v313
    %v315 = vmul.f32 %v314, 0.6931472
    %v316 = vmul.f32 %v134, %v308
    %v317 = vsub.f32 %v316, %v315
    %v318 = vsel %vm224, %v317, 0.0
    %319 = vadd.xlane.f32.xlu0 %v318
    %v320 = vpop.xlane.xlu0 %319
    %v321 = vrot.slane %v320, 4
    %v322 = vadd.f32 %v320, %v321
    %v323 = vrot.slane %v322, 2
    %v324 = vadd.f32 %v322, %v323
    %v325 = vrot.slane %v324, 1
    %v326 = vadd.f32 %v324, %v325
    %s327 = vtos %v326
    %s328 = sadd.f32 %s234, %s327
    %v329 = vstv %s328
    %330 = vst [vmem:[#allocation8] sm:$0xff] %v329
    // Predicated region
    $region26: #{tpu_custom_call.1} parent=1 // pred_check
      _
    $region27: #{tpu_custom_call.1} parent=1 // pred_check_branch
      %332 = sbr.rel (0) target = $region29
    $region28: #{tpu_custom_call.1} parent=1 // pred_region
      %s334 = ssub.s32 128, 128
      %335 = vsyncadd [#allocation4], %s334
      %s337 = sshll.u32 [#allocation8], 4
      %s338 = int_to_ptr.vmem [resolvable:$true] %s337
      %340 = dma.vmem_to_hbm [thread:$0]  %s338, 128, %s3, [#allocation4]
    $region29: #{tpu_custom_call.1} parent=1 // pred_fallthru
      _
    // Predicated region
    $region30: #{tpu_custom_call.1} parent=1 // pred_check
      _
    $region31: #{tpu_custom_call.1} parent=1 // pred_check_branch
      %342 = sbr.rel (0) target = $region33
    $region32: #{tpu_custom_call.1} parent=1 // pred_region
      %343 = dma.done [#allocation4], 128
    $region33: #{tpu_custom_call.1} parent=1 // pred_fallthru
      _
    %344 = vsyncpa [#allocation3], 1
    %345 = vsyncpa [#allocation6], 1
    %346 = vsyncpa [#allocation4], 1

</llo_original>
